<compile_context>
chip_gen: v5e
topology: v5e:2x2
jax: 0.10.0
libtpu: 0.0.40
codegen_flags: <defaults>
</compile_context>

<pallas_src>
import functools

import numpy as np
import jax
import jax.numpy as jnp
from jax.experimental import pallas as pl
from jax.experimental.pallas import tpu as pltpu

# Above the default scoped VMEM, safely below v7x's 64 MiB physical VMEM.
_VMEM_LIMIT_BYTES = 48 * 1024 * 1024


def _pick_tile(dim, candidates):
    for c in candidates:
        if dim % c == 0:
            return c
    return dim  # fall back to the full dimension (always a legal block dim)


@functools.lru_cache(maxsize=None)
def _roll_sign():
    """Probe pltpu.roll's shift convention once with a tiny eager kernel.

    Returns +1 if pltpu.roll(x, s, axis) == jnp.roll(x, s, axis) (result[j] = x[j - s]),
    else -1.  Keeps _row_shift() correct under either convention.
    """
    def kern(x_ref, o_ref):
        o_ref[...] = pltpu.roll(x_ref[...], 1, 0)

    x = jnp.arange(8 * 128, dtype=jnp.float32).reshape(8, 128)
    y = pl.pallas_call(kern, out_shape=jax.ShapeDtypeStruct((8, 128), jnp.float32))(x)
    return 1 if bool(y[1, 0] == x[0, 0]) else -1


def _row_shift(x, s):
    """Return y with y[p, :] = x[(p + s) % M, :].  Rows that wrap land only in rows that
    are masked out downstream (pad ring / filler rows), so wraparound is harmless."""
    if s == 0:
        return x
    m = x.shape[0]
    return pltpu.roll(x, (-_roll_sign() * s) % m, 0)


# ---------------------------------------------------------------------------
# Padded "plane" layout helpers.
# Activations live as (N * hp_pad * (W+2), C) bf16: each image is a zero-bordered
# (hp_pad, W+2) plane (1 pad row/col each side plus zero filler rows at the bottom so
# the per-image row count is a multiple of 16 = bf16 sublane tile).
# ---------------------------------------------------------------------------
def _padded_height(h, w):
    hp, wp = h + 2, w + 2
    while (hp * wp) % 16:
        hp += 1
    return hp


def _plane_mask(h, w, hp_pad, n):
    """(N*plane, 1) f32 validity mask (1 inside the image, 0 on ring/filler rows)."""
    wp = w + 2
    i = np.arange(hp_pad)[:, None]
    j = np.arange(wp)[None, :]
    valid = (i >= 1) & (i <= h) & (j >= 1) & (j <= w)
    m = valid.astype(np.float32).reshape(hp_pad * wp, 1)
    return jnp.asarray(np.tile(m, (n, 1)))


def _pool_select_matrix(h, w, hp_in, hp_out):
    """Per-image 0/1 matrix: padded (h, w) plane -> padded (h/2, w/2) plane.

    Row q is all-zero for ring/filler positions, so the output plane's zero border is
    produced by the matmul itself."""
    wp_in, wp_out = w + 2, w // 2 + 2
    g = np.zeros((hp_out * wp_out, hp_in * wp_in), np.float32)
    for io in range(h // 2):
        for jo in range(w // 2):
            q = (io + 1) * wp_out + (jo + 1)
            p = (2 * io + 1) * wp_in + (2 * jo + 1)      # 2x2 window anchor
            g[q, p] = 1.0
    return jnp.asarray(g, jnp.bfloat16)


def _pool_flat_matrix(h, w, hp_in, n):
    """Block-diagonal 0/1 matrix: batch of padded planes -> (N*(h/2)*(w/2)) features."""
    wp_in = w + 2
    hh, ww = h // 2, w // 2
    plane = hp_in * wp_in
    g = np.zeros((n * hh * ww, n * plane), np.float32)
    for b in range(n):
        for io in range(hh):
            for jo in range(ww):
                g[b * hh * ww + io * ww + jo,
                  b * plane + (2 * io + 1) * wp_in + (2 * jo + 1)] = 1.0
    return jnp.asarray(g, jnp.bfloat16)


def _first_conv_operand(x_nhwc, hp_pad):
    """(N, H, W, 3) -> (N*plane, 27) bf16: zero-bordered plane with the 9 taps
    pre-gathered along the channel axis (K=27 single matmul for the cin=3 layer)."""
    n, h, w, _ = x_nhwc.shape
    wp = w + 2
    xp = jnp.pad(x_nhwc, ((0, 0), (1, hp_pad - h - 1), (1, 1), (0, 0)))
    taps = [jnp.roll(xp, (1 - dy, 1 - dx), axis=(1, 2))
            for dy in range(3) for dx in range(3)]
    return jnp.concatenate(taps, axis=-1).reshape(n * hp_pad * wp, 27)


# ---------------------------------------------------------------------------
# Fused conv3x3(padding=1) + folded BatchNorm(eval) + ReLU.
# Whole batch plane in one block; 9 roll-shifted bf16 matmuls, f32 accumulation,
# affine + ReLU + border mask, single aligned full-block store.
# ---------------------------------------------------------------------------
def _conv_bn_relu_kernel(x_ref, w_ref, scale_ref, shift_ref, mask_ref, o_ref, *, shifts):
    x = x_ref[...]                                     # (M, cin) bf16, whole batch
    m, tco = o_ref.shape
    acc = jnp.zeros((m, tco), jnp.float32)
    for k, s in enumerate(shifts):
        acc = acc + jnp.dot(_row_shift(x, s), w_ref[k],
                            preferred_element_type=jnp.float32)
    y = acc * scale_ref[...] + shift_ref[...]          # folded BN (includes conv bias)
    y = jnp.maximum(y, 0.0)
    y = y * mask_ref[...]                              # re-zero pad ring / filler rows
    o_ref[...] = y.astype(o_ref.dtype)                 # single full-block aligned store


def conv3x3_bn_relu(x_flat, w9, scale, shift, mask, *, wp):
    m, cin = x_flat.shape
    cout = w9.shape[2]
    # 256 keeps a 2-step "parallel" axis on the 512-channel layers for v7x's 2 TCs
    # while the weight DMAs stay >= 2.3 MB; weights are fetched exactly once per layer.
    tco = _pick_tile(cout, (256, 128))
    # Flattened-plane row shift of tap (dy, dx); matches weight order k = 3*dy + dx.
    shifts = tuple((dy - 1) * wp + (dx - 1) for dy in range(3) for dx in range(3))
    kernel = functools.partial(_conv_bn_relu_kernel, shifts=shifts)
    return pl.pallas_call(
        kernel,
        out_shape=jax.ShapeDtypeStruct((m, cout), jnp.bfloat16),
        grid=(cout // tco,),
        in_specs=[
            pl.BlockSpec((m, cin), lambda j: (0, 0)),          # whole batch, fetched once
            pl.BlockSpec((9, cin, tco), lambda j: (0, 0, j)),  # weights streamed once
            pl.BlockSpec((1, tco), lambda j: (0, j)),
            pl.BlockSpec((1, tco), lambda j: (0, j)),
            pl.BlockSpec((m, 1), lambda j: (0, 0)),
        ],
        out_specs=pl.BlockSpec((m, tco), lambda j: (0, j)),
        compiler_params=pltpu.CompilerParams(
            dimension_semantics=("parallel",),
            vmem_limit_bytes=_VMEM_LIMIT_BYTES,
        ),
    )(x_flat, w9, scale.reshape(1, cout), shift.reshape(1, cout), mask)


# First conv (cin=3): one K=27 matmul + folded BN + ReLU + mask.
def _conv1_kernel(x_ref, w_ref, scale_ref, shift_ref, mask_ref, o_ref):
    y = jnp.dot(x_ref[...], w_ref[...], preferred_element_type=jnp.float32)
    y = y * scale_ref[...] + shift_ref[...]
    y = jnp.maximum(y, 0.0)
    y = y * mask_ref[...]
    o_ref[...] = y.astype(o_ref.dtype)


def conv1_bn_relu(x27, w27, scale, shift, mask):
    m, k = x27.shape
    cout = w27.shape[1]
    return pl.pallas_call(
        _conv1_kernel,
        out_shape=jax.ShapeDtypeStruct((m, cout), jnp.bfloat16),
        grid=(1,),
        in_specs=[
            pl.BlockSpec((m, k), lambda j: (0, 0)),
            pl.BlockSpec((k, cout), lambda j: (0, 0)),
            pl.BlockSpec((1, cout), lambda j: (0, 0)),
            pl.BlockSpec((1, cout), lambda j: (0, 0)),
            pl.BlockSpec((m, 1), lambda j: (0, 0)),
        ],
        out_specs=pl.BlockSpec((m, cout), lambda j: (0, 0)),
        compiler_params=pltpu.CompilerParams(
            dimension_semantics=("parallel",),
            vmem_limit_bytes=_VMEM_LIMIT_BYTES,
        ),
    )(x27, w27, scale.reshape(1, cout), shift.reshape(1, cout), mask)


# ---------------------------------------------------------------------------
# Fused MaxPool2d(2) + zero re-pad: roll+max builds the 2x2 window max on the padded
# plane; a constant 0/1 selection matrix (MXU) gathers the window anchors and scatters
# them straight into the next block's zero-bordered plane.  One HBM pass, no XLA glue.
# ---------------------------------------------------------------------------
def _maxpool_kernel(x_ref, g_ref, o_ref, *, wp_in):
    x = x_ref[...]                                    # (plane_in, C) bf16
    cm = jnp.maximum(x, _row_shift(x, 1))             # max over column pair (j, j+1)
    rm = jnp.maximum(cm, _row_shift(cm, wp_in))       # + max over row pair (i, i+1)
    o_ref[...] = jnp.dot(g_ref[...], rm,
                         preferred_element_type=jnp.float32).astype(o_ref.dtype)


def maxpool2x2(x_flat, g, *, wp_in):
    m_in, c = x_flat.shape
    p_out, p_in = g.shape
    ng = m_in // p_in                                 # grid steps (per-image or whole batch)
    kernel = functools.partial(_maxpool_kernel, wp_in=wp_in)
    return pl.pallas_call(
        kernel,
        out_shape=jax.ShapeDtypeStruct((ng * p_out, c), jnp.bfloat16),
        grid=(ng,),
        in_specs=[pl.BlockSpec((p_in, c), lambda i: (i, 0)),
                  pl.BlockSpec((p_out, p_in), lambda i: (0, 0))],   # fetched once
        out_specs=pl.BlockSpec((p_out, c), lambda i: (i, 0)),
        compiler_params=pltpu.CompilerParams(
            dimension_semantics=("parallel",),
            vmem_limit_bytes=_VMEM_LIMIT_BYTES,
        ),
    )(x_flat, g)


# ---------------------------------------------------------------------------
# Linear (+ bias, optional ReLU); weights stored (din, dout) bf16.
# ---------------------------------------------------------------------------
def _linear_kernel(x_ref, w_ref, b_ref, o_ref, *, relu):
    y = jnp.dot(x_ref[...], w_ref[...], preferred_element_type=jnp.float32)
    y = y + b_ref[...]
    if relu:
        y = jnp.maximum(y, 0.0)
    o_ref[...] = y.astype(o_ref.dtype)


def linear(x, w_in_out, b, *, relu, out_dtype=jnp.bfloat16):
    m, k = x.shape
    n_out = w_in_out.shape[1]
    tm = _pick_tile(m, (256, 128, 64, 32, 16))
    # fc1/fc2 are weight-bandwidth bound at tiny batch: 1024-wide tiles give 8 MB weight
    # DMAs (16 MB double-buffered) and a 4-step parallel axis for v7x's two TensorCores.
    tn = _pick_tile(n_out, (1024, 512, 256, 128))
    kernel = functools.partial(_linear_kernel, relu=relu)
    return pl.pallas_call(
        kernel,
        out_shape=jax.ShapeDtypeStruct((m, n_out), out_dtype),
        grid=(m // tm, n_out // tn),
        in_specs=[
            pl.BlockSpec((tm, k), lambda i, j: (i, 0)),
            pl.BlockSpec((k, tn), lambda i, j: (0, j)),
            pl.BlockSpec((1, tn), lambda i, j: (0, j)),
        ],
        out_specs=pl.BlockSpec((tm, tn), lambda i, j: (i, j)),
        compiler_params=pltpu.CompilerParams(
            dimension_semantics=("parallel", "parallel"),
            vmem_limit_bytes=_VMEM_LIMIT_BYTES,
        ),
    )(x, w_in_out, b.reshape(1, n_out))


# ---------------------------------------------------------------------------
# Deterministic synthetic parameters (BN folded into per-channel scale/shift,
# weights stored in kernel-native layouts in bf16).
# ---------------------------------------------------------------------------
_CONV_CFG = [
    (3, 64), (64, 64),
    (64, 128), (128, 128),
    (128, 256), (256, 256), (256, 256), (256, 256),
    (256, 512), (512, 512), (512, 512), (512, 512),
    (512, 512), (512, 512), (512, 512), (512, 512),
]
_BLOCK_SIZES = (2, 2, 4, 4, 4)  # convs per block, MaxPool2d(2) after each block


def init_params(key):
    eps = 1e-5
    convs = []
    for cin, cout in _CONV_CFG:
        key, k1, k2, k3, k4, k5, k6 = jax.random.split(key, 7)
        fan_in = cin * 9
        w = jax.random.normal(k1, (cout, cin, 3, 3), jnp.float32) / jnp.sqrt(fan_in)
        b = 0.01 * jax.random.normal(k2, (cout,), jnp.float32)
        gamma = 1.0 + 0.1 * jax.random.normal(k3, (cout,), jnp.float32)
        beta = 0.1 * jax.random.normal(k4, (cout,), jnp.float32)
        running_mean = 0.05 * jax.random.normal(k5, (cout,), jnp.float32)
        running_var = jax.random.uniform(k6, (cout,), jnp.float32, 0.5, 1.5)
        scale = gamma / jnp.sqrt(running_var + eps)
        shift = beta + (b - running_mean) * scale
        # (Cout, Cin, kh, kw) -> (kh, kw, Cin, Cout) -> (9, Cin, Cout), k = 3*dy + dx.
        w9 = jnp.transpose(w, (2, 3, 1, 0)).reshape(9, cin, cout).astype(jnp.bfloat16)
        convs.append({"w": w9, "scale": scale, "shift": shift})

    def linear_init(k, din, dout):
        k1, k2 = jax.random.split(k)
        w = jax.random.normal(k1, (dout, din), jnp.float32) / jnp.sqrt(din)
        b = 0.01 * jax.random.normal(k2, (dout,), jnp.float32)
        # Pre-transposed (din, dout) bf16: matmul layout, no per-call transpose.
        return jnp.transpose(w).astype(jnp.bfloat16), b

    key, kf1, kf2, kf3 = jax.random.split(key, 4)
    fc1_w, fc1_b = linear_init(kf1, 512, 4096)
    fc2_w, fc2_b = linear_init(kf2, 4096, 4096)
    fc3_w, fc3_b = linear_init(kf3, 4096, 10)

    return {
        "convs": convs,
        "fc1_w": fc1_w, "fc1_b": fc1_b,
        "fc2_w": fc2_w, "fc2_b": fc2_b,
        "fc3_w": fc3_w, "fc3_b": fc3_b,
    }


# ---------------------------------------------------------------------------
# Full VGG forward (eval semantics).
# ---------------------------------------------------------------------------
def vgg_forward(x_nchw, params):
    # PyTorch NCHW -> NHWC (channels on the lane dim), activations in bf16.
    x = jnp.transpose(x_nchw, (0, 2, 3, 1)).astype(jnp.bfloat16)
    n, h, w, _ = x.shape

    hp = _padded_height(h, w)
    mask = _plane_mask(h, w, hp, n)

    idx = 0
    flat = None
    feats = None
    for bi, nconv in enumerate(_BLOCK_SIZES):
        for _ in range(nconv):
            p = params["convs"][idx]
            if idx == 0:
                # cin=3 special case: K=27 operand (9 taps x 3 channels) -> one matmul.
                x27 = _first_conv_operand(x, hp)
                flat = conv1_bn_relu(x27, p["w"].reshape(27, -1), p["scale"],
                                     p["shift"], mask)
            else:
                flat = conv3x3_bn_relu(flat, p["w"], p["scale"], p["shift"], mask,
                                       wp=w + 2)
            idx += 1
        if bi < len(_BLOCK_SIZES) - 1:
            h2, w2 = h // 2, w // 2
            hp2 = _padded_height(h2, w2)
            flat = maxpool2x2(flat, _pool_select_matrix(h, w, hp, hp2), wp_in=w + 2)
            h, w, hp = h2, w2, hp2
            mask = _plane_mask(h, w, hp, n)
        else:
            # Last block: pool straight to (N, 512) features (spatial 2x2 -> 1x1).
            feats = maxpool2x2(flat, _pool_flat_matrix(h, w, hp, n), wp_in=w + 2)

    feats = feats.reshape(n, -1)  # spatial is 1x1 -> matches PyTorch's view(N, -1)

    out = linear(feats, params["fc1_w"], params["fc1_b"], relu=True)
    # TODO(synk): nn.Dropout is identity in eval mode; no stochastic kernel emitted.
    out = linear(out, params["fc2_w"], params["fc2_b"], relu=True)
    # Dropout: identity in eval mode.
    out = linear(out, params["fc3_w"], params["fc3_b"], relu=False,
                 out_dtype=jnp.float32)
    return out


if __name__ == "__main__":
    _roll_sign()  # one-time eager probe of pltpu.roll's shift convention (cached)

    key = jax.random.PRNGKey(0)
    pkey, xkey = jax.random.split(key)
    params = init_params(pkey)
    # 32x32 input so that 5 maxpools reduce spatial to 1x1, matching Linear(512, 4096).
    x = jax.random.normal(xkey, (2, 3, 32, 32), dtype=jnp.float32)

    fwd = jax.jit(vgg_forward)
    out = jax.block_until_ready(fwd(x, params))
    assert out.shape == (2, 10), out.shape
    assert jnp.all(jnp.isfinite(out))
    print("KERNEL_OK")
</pallas_src>

<mosaic_0001>
module attributes {stable_mosaic.version = 11 : i64} {
  func.func @kern(%arg0: memref<8x128xf32, #tpu.memory_space<vmem>>, %arg1: memref<8x128xf32, #tpu.memory_space<vmem>>) attributes {dimension_semantics = [], scalar_prefetch = 0 : i64, scratch_operands = 0 : i64, tpu.core_type = #tpu.core_type<tc>} {
    %c0 = arith.constant 0 : index
    %c0_0 = arith.constant 0 : index
    %0 = vector.load %arg0[%c0, %c0_0] : memref<8x128xf32, #tpu.memory_space<vmem>>, vector<8x128xf32>
    %c1_i32 = arith.constant 1 : i32
    %1 = tpu.dynamic_rotate %0 by %c1_i32 dim 0 : vector<8x128xf32>, i32 -> vector<8x128xf32>
    %c0_1 = arith.constant 0 : index
    %c0_2 = arith.constant 0 : index
    %2 = vector.load %arg1[%c0_1, %c0_2] : memref<8x128xf32, #tpu.memory_space<vmem>>, vector<8x128xf32>
    tpu.vector_store %arg1[%c0_1, %c0_2], %1 {strides = array<i32>} : memref<8x128xf32, #tpu.memory_space<vmem>>, vector<8x128xf32>,
    return
  }
}

</mosaic_0001>

<llo_original>
// kernel: tpu_custom_call.1
$region0: #{tpu_custom_call.1}
  #allocation0 [shape = 'u32[]', space=smem, size = 0x4, offset = 0x4, fixed_abs, tag = 'smem constant byte address 0x4 - core index']
  #allocation1 [shape = 'u32[72,128]{1,0:T(1,128)}', space=vmem, size = 0x9000, scoped, tag = 'internal scratch']
  %s0 = inlined_call_operand.hbm [shape: f32[8,128], index: 0, kind: input, shape index: {}]
  %s1 = inlined_call_operand.hbm [shape: f32[8,128], index: 1, kind: output, shape index: {}]
  %s2 = sld [smem:[#allocation0]]
  $region18: #{tpu_custom_call.1} parent=0
    _
  %s4 = ssub.s32 1, %s2
  %s5 = scalar_select 0, %s4, %s2
  $region1: #{tpu_custom_call.1} parent=0
    #allocation2 [shape = 'u8[4096]{0}', space=vmem, size = 0x1000, scoped, tag = 'input window, operand 0, single buffered']
    #allocation3 [shape = 's32[1]{0}', space=sflag, size = 0x4, scoped, tag = 'scoped memory for tpu_custom_call.1']
    #allocation4 [shape = 's32[1]{0}', space=sflag, size = 0x4, scoped, tag = 'scoped memory for tpu_custom_call.1']
    #allocation5 [shape = 'u8[4096]{0}', space=vmem, size = 0x1000, scoped, tag = 'output window, operand 0, single buffered']
    %6 = vsyncpa [#allocation3], 0
    %7 = vsyncpa [#allocation4], 0
    // Predicated region
    $region2: #{tpu_custom_call.1} parent=1 // pred_check
      _
    $region3: #{tpu_custom_call.1} parent=1 // pred_check_branch
      %9 = sbr.rel (0) target = $region5
    $region4: #{tpu_custom_call.1} parent=1 // pred_region
      %11 = vsyncadd [#allocation3], 0
      %s13 = sshll.u32 %s0, 4
      %s14 = int_to_ptr.hbm [resolvable:$true] %s13
      %s15 = sshll.u32 [#allocation2], 4
      %s16 = int_to_ptr.vmem [resolvable:$true] %s15
      %18 = dma.hbm_to_vmem [thread:$0]  %s14, 128, %s16, [#allocation3]
    $region5: #{tpu_custom_call.1} parent=1 // pred_fallthru
      _
    // Predicated region
    $region6: #{tpu_custom_call.1} parent=1 // pred_check
      _
    $region7: #{tpu_custom_call.1} parent=1 // pred_check_branch
      %20 = sbr.rel (0) target = $region9
    $region8: #{tpu_custom_call.1} parent=1 // pred_region
      %22 = dma.done [#allocation3], 128
    $region9: #{tpu_custom_call.1} parent=1 // pred_fallthru
      _
    %v23 = vld [vmem:[#allocation2] sm:$0xff]
    %v24 = vrot.slane %v23, 7
    %25 = vst [vmem:[#allocation5] sm:$0xff] %v24
    // Predicated region
    $region10: #{tpu_custom_call.1} parent=1 // pred_check
      _
    $region11: #{tpu_custom_call.1} parent=1 // pred_check_branch
      %27 = sbr.rel (0) target = $region13
    $region12: #{tpu_custom_call.1} parent=1 // pred_region
      %29 = vsyncadd [#allocation4], 0
      %s31 = sshll.u32 [#allocation5], 4
      %s32 = int_to_ptr.vmem [resolvable:$true] %s31
      %s33 = sshll.u32 %s1, 4
      %s34 = int_to_ptr.hbm [resolvable:$true] %s33
      %36 = dma.vmem_to_hbm [thread:$0]  %s32, 128, %s34, [#allocation4]
    $region13: #{tpu_custom_call.1} parent=1 // pred_fallthru
      _
    // Predicated region
    $region14: #{tpu_custom_call.1} parent=1 // pred_check
      _
    $region15: #{tpu_custom_call.1} parent=1 // pred_check_branch
      %38 = sbr.rel (0) target = $region17
    $region16: #{tpu_custom_call.1} parent=1 // pred_region
      %40 = dma.done [#allocation4], 128
    $region17: #{tpu_custom_call.1} parent=1 // pred_fallthru
      _
    %41 = vsyncpa [#allocation3], 1
    %42 = vsyncpa [#allocation4], 1

</llo_original>
